<compile_context>
chip_gen: v6e
topology: v6e:2x2x1
jax: 0.10.0
libtpu: 0.0.40
codegen_flags: <defaults>
</compile_context>

<pallas_src>
import functools

import numpy as np
import jax
import jax.numpy as jnp
from jax import lax
from jax.experimental import pallas as pl
from jax.experimental.pallas import tpu as pltpu  # noqa: F401  (TPU backend assumed)


# -----------------------------------------------------------------------------
# Fused Pallas kernel: TemporalResidualUnit + BatchNorm1d (batch stats)
# -----------------------------------------------------------------------------
def dbt_fused_kernel(x_ref, w1_ref, b1_ref, w2_ref, b2_ref, g_ref, bt_ref, o_ref,
                     *, K, dilation, L, BL, C_out, eps):
    """All activations are (channels, BL_pad): channels on sublanes, batch*time on lanes."""
    x = x_ref[...]                                # (C_in, BL_pad)
    BLp = x.shape[1]

    # Hoisted lane indices shared by both blocks and the BN reduction.
    lane = lax.broadcasted_iota(jnp.int32, (1, BLp), 1)
    col = lane % L                                # time index within each batch segment
    valid = (lane < BL).astype(jnp.float32)       # 1.0 on real lanes, 0.0 on lane padding

    def stacked_shifts(a):
        """Stack the K causally-shifted copies of `a` along the channel (sublane) axis.

        Copy k is `a` delayed by s = (K-1-k)*dilation, with zeros injected at the start
        of every batch segment so a shift never leaks values across batch boundaries.
        One matmul against the pre-composed taps then implements the whole dilated conv
        + 1x1 mix of a residual block.
        """
        C = a.shape[0]
        copies = []
        for k in range(K):                        # K is a small static constant
            s = (K - 1 - k) * dilation
            if s == 0:
                copies.append(a)
            else:
                shifted = jnp.concatenate(
                    [jnp.zeros((C, s), a.dtype), a[:, :BLp - s]], axis=1)
                copies.append(jnp.where(col >= s, shifted, 0.0))
        return jnp.concatenate(copies, axis=0)    # (K*C, BL_pad)

    # ---- block 1 (+ folded 1x1 downsample residual): one matmul -> (2*C_out, BL_pad)
    big1 = jnp.dot(w1_ref[...], stacked_shifts(x),
                   preferred_element_type=jnp.float32) + b1_ref[...]
    h1 = jnp.maximum(big1[:C_out], 0.0)           # relu(mix1)   (dropout = identity)
    res = big1[C_out:]                            # downsample(x)

    # ---- block 2: one matmul
    mix2 = jnp.dot(w2_ref[...], stacked_shifts(h1),
                   preferred_element_type=jnp.float32) + b2_ref[...]
    out = jnp.maximum(jnp.maximum(mix2, 0.0) + res, 0.0)

    # ---- BatchNorm1d, training-mode batch statistics.  With (C, BL_pad) layout the
    # per-channel reduction over (batch, length) is a single masked lane reduction per
    # row; divide by the true element count BL (not the padded lane width).
    inv_n = 1.0 / BL
    out_m = out * valid
    mean = jnp.sum(out_m, axis=1, keepdims=True) * inv_n
    msq = jnp.sum(out_m * out_m, axis=1, keepdims=True) * inv_n
    inv = lax.rsqrt(msq - mean * mean + eps)
    o_ref[...] = (out - mean) * inv * g_ref[...] + bt_ref[...]


# -----------------------------------------------------------------------------
# Wrapper: host-side weight pre-composition + pallas_call plumbing
# -----------------------------------------------------------------------------
def dbt_forward(x, params, *, K, dilation):
    B, C_in, L = x.shape
    C_out = params["w1f"].shape[0]
    BL = B * L
    BLp = pl.cdiv(BL, 128) * 128                   # lane-dense output width

    def composed(wf, bf, wb, bb, wl, bl):
        """Fold the 1x1 mix into the conv taps of one residual block.

        Effective causal tap k (applied at lag (K-1-k)*dilation):
            W_eff[k] = wl[:, :C_out] @ wf[:, :, k] + wl[:, C_out:] @ wb[:, :, K-1-k]
        (the backward branch uses reversed taps -- see derivation in the header).
        """
        wlf = wl[:, :C_out, 0]
        wlr = wl[:, C_out:, 0]
        taps = [wlf @ wf[:, :, k] + wlr @ wb[:, :, K - 1 - k] for k in range(K)]
        W = jnp.concatenate(taps, axis=1)          # (C_out, K * C_block_in)
        b = wlf @ bf + wlr @ bb + bl
        return W, b

    W1, b1 = composed(params["w1f"], params["b1f"], params["w1b"], params["b1b"],
                      params["wl1"], params["bl1"])
    W2, b2 = composed(params["w2f"], params["b2f"], params["w2b"], params["b2b"],
                      params["wl2"], params["bl2"])

    # Fold the 1x1 downsample into block 1's matmul as extra output rows: the downsample
    # only reads the unshifted (shift-0 == tap K-1) copy of x.
    wd = params["wd"][:, :, 0]                     # (C_out, C_in)
    wd_row = jnp.concatenate(
        [jnp.zeros((C_out, (K - 1) * C_in), wd.dtype), wd], axis=1)
    W1_big = jnp.concatenate([W1, wd_row], axis=0)                 # (2*C_out, K*C_in)
    b1_big = jnp.concatenate([b1, params["bd"]]).reshape(-1, 1)    # (2*C_out, 1)

    # Flatten (B, C, L) -> (C, B*L): channels on sublanes, batch*time on lanes,
    # then pad lanes to a multiple of 128 (padding is masked inside the kernel).
    x_t = jnp.transpose(x, (1, 0, 2)).reshape(C_in, BL)
    if BLp != BL:
        x_t = jnp.pad(x_t, ((0, 0), (0, BLp - BL)))

    # Single fused invocation; all operands fit comfortably in VMEM at these sizes.
    # NOTE(v7x): if B grows large, reintroduce a batch-parallel grid axis (with a
    # separate cross-batch BN reduction) so work shards across the two TensorCores.
    y_flat = pl.pallas_call(
        functools.partial(dbt_fused_kernel, K=K, dilation=dilation, L=L, BL=BL,
                          C_out=C_out, eps=1e-5),
        out_shape=jax.ShapeDtypeStruct((C_out, BLp), jnp.float32),
    )(x_t, W1_big, b1_big, W2, b2.reshape(-1, 1),
      params["gamma"].reshape(-1, 1), params["beta"].reshape(-1, 1))

    # (C_out, BL_pad) -> drop lane padding -> (B, C_out, L)
    return jnp.transpose(y_flat[:, :BL].reshape(C_out, B, L), (1, 0, 2))


# -----------------------------------------------------------------------------
# Pure-JAX reference (mirrors the PyTorch forward op-by-op, for verification)
# -----------------------------------------------------------------------------
def _torch_conv1d(x, w, b, pad, dil):
    y = lax.conv_general_dilated(
        x, w, window_strides=(1,), padding=[(pad, pad)],
        rhs_dilation=(dil,), dimension_numbers=("NCH", "OIH", "NCH"))
    return y + b[None, :, None]


def reference_forward(x, p, *, K, dilation):
    pad = (K - 1) * dilation
    L = x.shape[-1]

    def block(inp, wf, bf, wb, bb, wl, bl):
        f = _torch_conv1d(inp, wf, bf, pad, dilation)
        r = jnp.flip(_torch_conv1d(jnp.flip(inp, -1), wb, bb, pad, dilation), -1)
        m = _torch_conv1d(jnp.concatenate([f, r], axis=1), wl, bl, 0, 1)
        return jax.nn.relu(m[:, :, :L])          # chomp + relu (dropout = identity)

    h1 = block(x, p["w1f"], p["b1f"], p["w1b"], p["b1b"], p["wl1"], p["bl1"])
    h2 = block(h1, p["w2f"], p["b2f"], p["w2b"], p["b2b"], p["wl2"], p["bl2"])
    res = _torch_conv1d(x, p["wd"], p["bd"], 0, 1)
    out = jax.nn.relu(h2 + res)
    mean = out.mean(axis=(0, 2), keepdims=True)
    var = ((out - mean) ** 2).mean(axis=(0, 2), keepdims=True)
    return (p["gamma"][None, :, None] * (out - mean) * lax.rsqrt(var + 1e-5)
            + p["beta"][None, :, None])


# -----------------------------------------------------------------------------
# Main
# -----------------------------------------------------------------------------
if __name__ == "__main__":
    B, C_in, C_out, L = 2, 4, 8, 32          # in_feature=4, out_feature=8, seq_len=32
    level, K = 2, 2
    dilation = 2 ** (level - 1)              # = 2, padding = (K-1)*dilation = 2

    key = jax.random.PRNGKey(0)
    keys = jax.random.split(key, 16)
    sc = 0.3

    params = {
        "w1f": sc * jax.random.normal(keys[0], (C_out, C_in, K), jnp.float32),
        "b1f": sc * jax.random.normal(keys[1], (C_out,), jnp.float32),
        "w1b": sc * jax.random.normal(keys[2], (C_out, C_in, K), jnp.float32),
        "b1b": sc * jax.random.normal(keys[3], (C_out,), jnp.float32),
        "wl1": sc * jax.random.normal(keys[4], (C_out, 2 * C_out, 1), jnp.float32),
        "bl1": sc * jax.random.normal(keys[5], (C_out,), jnp.float32),
        "w2f": sc * jax.random.normal(keys[6], (C_out, C_out, K), jnp.float32),
        "b2f": sc * jax.random.normal(keys[7], (C_out,), jnp.float32),
        "w2b": sc * jax.random.normal(keys[8], (C_out, C_out, K), jnp.float32),
        "b2b": sc * jax.random.normal(keys[9], (C_out,), jnp.float32),
        "wl2": sc * jax.random.normal(keys[10], (C_out, 2 * C_out, 1), jnp.float32),
        "bl2": sc * jax.random.normal(keys[11], (C_out,), jnp.float32),
        "wd":  sc * jax.random.normal(keys[12], (C_out, C_in, 1), jnp.float32),
        "bd":  sc * jax.random.normal(keys[13], (C_out,), jnp.float32),
        "gamma": jnp.ones((C_out,), jnp.float32),   # BatchNorm default affine init
        "beta":  jnp.zeros((C_out,), jnp.float32),
    }
    x = jax.random.normal(keys[15], (B, C_in, L), jnp.float32)

    y = dbt_forward(x, params, K=K, dilation=dilation)
    y = jax.block_until_ready(y)

    y_ref = reference_forward(x, params, K=K, dilation=dilation)
    assert y.shape == (B, C_out, L)
    np.testing.assert_allclose(np.asarray(y), np.asarray(y_ref), rtol=1e-4, atol=1e-4)

    print("KERNEL_OK")
</pallas_src>

<mosaic_0001>
module attributes {stable_mosaic.version = 11 : i64} {
  func.func @dbt_fused_kernel(%arg0: memref<4x128xf32, #tpu.memory_space<vmem>>, %arg1: memref<16x8xf32, #tpu.memory_space<vmem>>, %arg2: memref<16x1xf32, #tpu.memory_space<vmem>>, %arg3: memref<8x16xf32, #tpu.memory_space<vmem>>, %arg4: memref<8x1xf32, #tpu.memory_space<vmem>>, %arg5: memref<8x1xf32, #tpu.memory_space<vmem>>, %arg6: memref<8x1xf32, #tpu.memory_space<vmem>>, %arg7: memref<8x128xf32, #tpu.memory_space<vmem>>) attributes {dimension_semantics = [], scalar_prefetch = 0 : i64, scratch_operands = 0 : i64, tpu.core_type = #tpu.core_type<tc>} {
    %c0 = arith.constant 0 : index
    %c0_0 = arith.constant 0 : index
    %0 = vector.load %arg0[%c0, %c0_0] : memref<4x128xf32, #tpu.memory_space<vmem>>, vector<4x128xf32>
    %1 = tpu.iota {dimensions = array<i32: 1>} : vector<1x128xi32>
    %c32_i32 = arith.constant 32 : i32
    %c0_i32 = arith.constant 0 : i32
    %2 = arith.cmpi eq, %c32_i32, %c0_i32 : i32
    %c1_i32 = arith.constant 1 : i32
    %3 = arith.select %2, %c1_i32, %c32_i32 : i32
    %4 = vector.broadcast %3 : i32 to vector<1x128xi32>
    %5 = arith.remsi %1, %4 : vector<1x128xi32>
    %c0_i32_1 = arith.constant 0 : i32
    %6 = vector.broadcast %c0_i32_1 : i32 to vector<1x128xi32>
    %7 = arith.cmpi ne, %5, %6 : vector<1x128xi32>
    %c0_i32_2 = arith.constant 0 : i32
    %8 = vector.broadcast %c0_i32_2 : i32 to vector<1x128xi32>
    %9 = arith.cmpi slt, %5, %8 : vector<1x128xi32>
    %c0_i32_3 = arith.constant 0 : i32
    %10 = arith.cmpi slt, %3, %c0_i32_3 : i32
    %11 = vector.broadcast %10 : i1 to vector<1x128xi1>
    %12 = vector.broadcast %11 : vector<1x128xi1> to vector<1x128xi1>
    %13 = arith.xori %9, %12 : vector<1x128xi1>
    %14 = arith.andi %13, %7 : vector<1x128xi1>
    %15 = vector.broadcast %3 : i32 to vector<1x128xi32>
    %16 = arith.addi %5, %15 : vector<1x128xi32>
    %17 = arith.select %14, %16, %5 : vector<1x128xi1>, vector<1x128xi32>
    %c64_i32 = arith.constant 64 : i32
    %18 = vector.broadcast %c64_i32 : i32 to vector<1x128xi32>
    %19 = arith.cmpi slt, %1, %18 : vector<1x128xi32>
    %20 = arith.extui %19 : vector<1x128xi1> to vector<1x128xi32>
    %21 = arith.sitofp %20 : vector<1x128xi32> to vector<1x128xf32>
    %c0_4 = arith.constant 0 : index
    %c0_5 = arith.constant 0 : index
    %22 = vector.load %arg1[%c0_4, %c0_5] : memref<16x8xf32, #tpu.memory_space<vmem>>, vector<16x8xf32>
    %cst = arith.constant 0.000000e+00 : f32
    %23 = vector.broadcast %cst : f32 to vector<4x2xf32>
    %24 = vector.extract_strided_slice %0 {offsets = [0, 0], sizes = [4, 126], strides = [1, 1]} : vector<4x128xf32> to vector<4x126xf32>
    %25 = tpu.concatenate %23, %24 in 1 : vector<4x2xf32>, vector<4x126xf32> -> vector<4x128xf32>
    %c2_i32 = arith.constant 2 : i32
    %26 = vector.broadcast %c2_i32 : i32 to vector<1x128xi32>
    %27 = arith.cmpi sge, %17, %26 : vector<1x128xi32>
    %cst_6 = arith.constant 0.000000e+00 : f32
    %28 = vector.shape_cast %27 : vector<1x128xi1> to vector<1x128xi1>
    %29 = vector.broadcast %28 : vector<1x128xi1> to vector<4x128xi1>
    %30 = vector.broadcast %cst_6 : f32 to vector<4x128xf32>
    %31 = arith.select %29, %25, %30 : vector<4x128xi1>, vector<4x128xf32>
    %32 = tpu.concatenate %31, %0 in 0 : vector<4x128xf32>, vector<4x128xf32> -> vector<8x128xf32>
    %cst_7 = arith.constant dense<0.000000e+00> : vector<16x128xf32>
    %33 = tpu.matmul %22, %32, %cst_7 {dimension_numbers = #tpu.dot_dimension_numbers<[1], [0], [0], [1], [0, 0, 1, 1], [], []>} : vector<16x8xf32>, vector<8x128xf32>, vector<16x128xf32> -> vector<16x128xf32>
    %c0_8 = arith.constant 0 : index
    %c0_9 = arith.constant 0 : index
    %34 = vector.load %arg2[%c0_8, %c0_9] : memref<16x1xf32, #tpu.memory_space<vmem>>, vector<16x1xf32>
    %35 = vector.broadcast %34 : vector<16x1xf32> to vector<16x128xf32>
    %36 = arith.addf %33, %35 : vector<16x128xf32>
    %37 = vector.extract_strided_slice %36 {offsets = [0, 0], sizes = [8, 128], strides = [1, 1]} : vector<16x128xf32> to vector<8x128xf32>
    %cst_10 = arith.constant 0.000000e+00 : f32
    %38 = vector.broadcast %cst_10 : f32 to vector<8x128xf32>
    %39 = arith.maximumf %37, %38 : vector<8x128xf32>
    %40 = vector.extract_strided_slice %36 {offsets = [8, 0], sizes = [8, 128], strides = [1, 1]} : vector<16x128xf32> to vector<8x128xf32>
    %c0_11 = arith.constant 0 : index
    %c0_12 = arith.constant 0 : index
    %41 = vector.load %arg3[%c0_11, %c0_12] : memref<8x16xf32, #tpu.memory_space<vmem>>, vector<8x16xf32>
    %cst_13 = arith.constant 0.000000e+00 : f32
    %42 = vector.broadcast %cst_13 : f32 to vector<8x2xf32>
    %43 = vector.extract_strided_slice %39 {offsets = [0, 0], sizes = [8, 126], strides = [1, 1]} : vector<8x128xf32> to vector<8x126xf32>
    %44 = tpu.concatenate %42, %43 in 1 : vector<8x2xf32>, vector<8x126xf32> -> vector<8x128xf32>
    %c2_i32_14 = arith.constant 2 : i32
    %45 = vector.broadcast %c2_i32_14 : i32 to vector<1x128xi32>
    %46 = arith.cmpi sge, %17, %45 : vector<1x128xi32>
    %cst_15 = arith.constant 0.000000e+00 : f32
    %47 = vector.shape_cast %46 : vector<1x128xi1> to vector<1x128xi1>
    %48 = vector.broadcast %47 : vector<1x128xi1> to vector<8x128xi1>
    %49 = vector.broadcast %cst_15 : f32 to vector<8x128xf32>
    %50 = arith.select %48, %44, %49 : vector<8x128xi1>, vector<8x128xf32>
    %51 = tpu.concatenate %50, %39 in 0 : vector<8x128xf32>, vector<8x128xf32> -> vector<16x128xf32>
    %cst_16 = arith.constant dense<0.000000e+00> : vector<8x128xf32>
    %52 = tpu.matmul %41, %51, %cst_16 {dimension_numbers = #tpu.dot_dimension_numbers<[1], [0], [0], [1], [0, 0, 1, 1], [], []>} : vector<8x16xf32>, vector<16x128xf32>, vector<8x128xf32> -> vector<8x128xf32>
    %c0_17 = arith.constant 0 : index
    %c0_18 = arith.constant 0 : index
    %53 = vector.load %arg4[%c0_17, %c0_18] : memref<8x1xf32, #tpu.memory_space<vmem>>, vector<8x1xf32>
    %54 = vector.broadcast %53 : vector<8x1xf32> to vector<8x128xf32>
    %55 = arith.addf %52, %54 : vector<8x128xf32>
    %cst_19 = arith.constant 0.000000e+00 : f32
    %56 = vector.broadcast %cst_19 : f32 to vector<8x128xf32>
    %57 = arith.maximumf %55, %56 : vector<8x128xf32>
    %58 = arith.addf %57, %40 : vector<8x128xf32>
    %cst_20 = arith.constant 0.000000e+00 : f32
    %59 = vector.broadcast %cst_20 : f32 to vector<8x128xf32>
    %60 = arith.maximumf %58, %59 : vector<8x128xf32>
    %61 = vector.broadcast %21 : vector<1x128xf32> to vector<8x128xf32>
    %62 = arith.mulf %60, %61 : vector<8x128xf32>
    %cst_21 = arith.constant dense<0.000000e+00> : vector<8xf32>
    %63 = vector.multi_reduction <add>, %62, %cst_21 [1] : vector<8x128xf32> to vector<8xf32>
    %64 = vector.shape_cast %63 : vector<8xf32> to vector<8x1xf32>
    %cst_22 = arith.constant 1.562500e-02 : f32
    %65 = vector.broadcast %cst_22 : f32 to vector<8x1xf32>
    %66 = arith.mulf %64, %65 : vector<8x1xf32>
    %67 = arith.mulf %62, %62 : vector<8x128xf32>
    %cst_23 = arith.constant dense<0.000000e+00> : vector<8xf32>
    %68 = vector.multi_reduction <add>, %67, %cst_23 [1] : vector<8x128xf32> to vector<8xf32>
    %69 = vector.shape_cast %68 : vector<8xf32> to vector<8x1xf32>
    %cst_24 = arith.constant 1.562500e-02 : f32
    %70 = vector.broadcast %cst_24 : f32 to vector<8x1xf32>
    %71 = arith.mulf %69, %70 : vector<8x1xf32>
    %72 = arith.mulf %66, %66 : vector<8x1xf32>
    %73 = arith.subf %71, %72 : vector<8x1xf32>
    %cst_25 = arith.constant 9.99999974E-6 : f32
    %74 = vector.broadcast %cst_25 : f32 to vector<8x1xf32>
    %75 = arith.addf %73, %74 : vector<8x1xf32>
    %76 = math.rsqrt %75 : vector<8x1xf32>
    %77 = vector.broadcast %66 : vector<8x1xf32> to vector<8x128xf32>
    %78 = arith.subf %60, %77 : vector<8x128xf32>
    %79 = vector.broadcast %76 : vector<8x1xf32> to vector<8x128xf32>
    %80 = arith.mulf %78, %79 : vector<8x128xf32>
    %c0_26 = arith.constant 0 : index
    %c0_27 = arith.constant 0 : index
    %81 = vector.load %arg5[%c0_26, %c0_27] : memref<8x1xf32, #tpu.memory_space<vmem>>, vector<8x1xf32>
    %82 = vector.broadcast %81 : vector<8x1xf32> to vector<8x128xf32>
    %83 = arith.mulf %80, %82 : vector<8x128xf32>
    %c0_28 = arith.constant 0 : index
    %c0_29 = arith.constant 0 : index
    %84 = vector.load %arg6[%c0_28, %c0_29] : memref<8x1xf32, #tpu.memory_space<vmem>>, vector<8x1xf32>
    %85 = vector.broadcast %84 : vector<8x1xf32> to vector<8x128xf32>
    %86 = arith.addf %83, %85 : vector<8x128xf32>
    %c0_30 = arith.constant 0 : index
    %c0_31 = arith.constant 0 : index
    %87 = vector.load %arg7[%c0_30, %c0_31] : memref<8x128xf32, #tpu.memory_space<vmem>>, vector<8x128xf32>
    tpu.vector_store %arg7[%c0_30, %c0_31], %86 {strides = array<i32>} : memref<8x128xf32, #tpu.memory_space<vmem>>, vector<8x128xf32>,
    return
  }
}

</mosaic_0001>

<llo_original>
// kernel: tpu_custom_call.1
$region0: #{tpu_custom_call.1}
  #allocation0 [shape = 'u32[]', space=smem, size = 0x4, offset = 0x4, fixed_abs, tag = 'smem constant byte address 0x4 - core index']
  #allocation1 [shape = 'u32[144,128]{1,0:T(1,128)}', space=vmem, size = 0x12000, scoped, tag = 'internal scratch']
  %s0 = inlined_call_operand.vmem [shape: f32[4,128], index: 0, kind: input, shape index: {}]
  %s1 = inlined_call_operand.vmem [shape: f32[16,8], index: 1, kind: input, shape index: {}]
  %s2 = inlined_call_operand.vmem [shape: f32[16,1], index: 2, kind: input, shape index: {}]
  %s3 = inlined_call_operand.vmem [shape: f32[8,16], index: 3, kind: input, shape index: {}]
  %s4 = inlined_call_operand.vmem [shape: f32[8,1], index: 4, kind: input, shape index: {}]
  %s5 = inlined_call_operand.vmem [shape: f32[8,1], index: 5, kind: input, shape index: {}]
  %s6 = inlined_call_operand.vmem [shape: f32[8,1], index: 6, kind: input, shape index: {}]
  %s7 = inlined_call_operand.hbm [shape: f32[8,128], index: 7, kind: output, shape index: {}]
  %s8 = sld [smem:[#allocation0]]
  $region38: #{tpu_custom_call.1} parent=0
    _
  %s10 = ssub.s32 1, %s8
  %s11 = scalar_select 0, %s10, %s8
  $region1: #{tpu_custom_call.1} parent=0
    #allocation2 [shape = 'u8[4096]{0}', space=vmem, size = 0x1000, scoped, tag = 'output window, operand 0, single buffered']
    #allocation3 [shape = 's32[1]{0}', space=sflag, size = 0x4, scoped, tag = 'scoped memory for tpu_custom_call.1']
    %12 = vsyncpa [#allocation3], 0
    // Predicated region
    $region2: #{tpu_custom_call.1} parent=1 // pred_check
      _
    $region3: #{tpu_custom_call.1} parent=1 // pred_check_branch
      %14 = sbr.rel (0) target = $region5
    $region4: #{tpu_custom_call.1} parent=1 // pred_region
      _
    $region5: #{tpu_custom_call.1} parent=1 // pred_fallthru
      _
    // Predicated region
    $region6: #{tpu_custom_call.1} parent=1 // pred_check
      _
    $region7: #{tpu_custom_call.1} parent=1 // pred_check_branch
      %16 = sbr.rel (0) target = $region9
    $region8: #{tpu_custom_call.1} parent=1 // pred_region
      _
    $region9: #{tpu_custom_call.1} parent=1 // pred_fallthru
      _
    // Predicated region
    $region10: #{tpu_custom_call.1} parent=1 // pred_check
      _
    $region11: #{tpu_custom_call.1} parent=1 // pred_check_branch
      %18 = sbr.rel (0) target = $region13
    $region12: #{tpu_custom_call.1} parent=1 // pred_region
      _
    $region13: #{tpu_custom_call.1} parent=1 // pred_fallthru
      _
    // Predicated region
    $region14: #{tpu_custom_call.1} parent=1 // pred_check
      _
    $region15: #{tpu_custom_call.1} parent=1 // pred_check_branch
      %20 = sbr.rel (0) target = $region17
    $region16: #{tpu_custom_call.1} parent=1 // pred_region
      _
    $region17: #{tpu_custom_call.1} parent=1 // pred_fallthru
      _
    // Predicated region
    $region18: #{tpu_custom_call.1} parent=1 // pred_check
      _
    $region19: #{tpu_custom_call.1} parent=1 // pred_check_branch
      %22 = sbr.rel (0) target = $region21
    $region20: #{tpu_custom_call.1} parent=1 // pred_region
      _
    $region21: #{tpu_custom_call.1} parent=1 // pred_fallthru
      _
    // Predicated region
    $region22: #{tpu_custom_call.1} parent=1 // pred_check
      _
    $region23: #{tpu_custom_call.1} parent=1 // pred_check_branch
      %24 = sbr.rel (0) target = $region25
    $region24: #{tpu_custom_call.1} parent=1 // pred_region
      _
    $region25: #{tpu_custom_call.1} parent=1 // pred_fallthru
      _
    // Predicated region
    $region26: #{tpu_custom_call.1} parent=1 // pred_check
      _
    $region27: #{tpu_custom_call.1} parent=1 // pred_check_branch
      %26 = sbr.rel (0) target = $region29
    $region28: #{tpu_custom_call.1} parent=1 // pred_region
      _
    $region29: #{tpu_custom_call.1} parent=1 // pred_fallthru
      _
    %v27 = vld [vmem:[%s0] sm:$0xf]
    %v28 = vlaneseq
    %v29 = vand.u32 %v28, 127
    %vm30 = vcmp.lt.s32.totalorder %v29, 0
    %v31 = vsub.s32 0, %v29
    %v32 = vsel %vm30, %v31, %v29
    %v33 = vshrl.u32 %v32, 5
    %v34 = vand.u32 %v32, 31
    %v35 = vsub.s32 0, %v34
    %v36 = vsel %vm30, %v35, %v34
    %vm37 = vcmp.ne.s32.totalorder %v36, 0
    %vm38 = vcmp.lt.s32.totalorder %v36, 0
    %vm39 = vmand %vm38, %vm37
    %v40 = vadd.s32 %v36, 32
    %v41 = vsel %vm39, %v40, %v36
    %vm42 = vcmp.lt.s32.totalorder %v29, 64
    %v43 = vsel %vm42, 1, 0
    %v44 = vcvt.s32.f32 %v43
    %v45 = vld [vmem:[%s1] sm:$0xff]
    %v46 = vld [vmem:[%s1 + $0x8] sm:$0xff]
    %48 = vrot.lane.b32.xlu0 %v27, 2
    %v49 = vpop.permute.xlu0 %48
    %vm51 = vcmask 15360
    %v52 = vsel %vm51, 0.0, %v49
    %vm53 = vcmp.ge.s32.totalorder %v41, 2
    %v54 = vsel %vm53, 1, 0
    %vm55 = vcmp.eq.s32.totalorder %v54, 1
    %v56 = vsel %vm55, %v52, 0.0
    %v57 = vrot.slane %v27, 4
    %vm59 = vcmask 1043456
    %v60 = vsel %vm59, %v56, %v57
    %v61 = vld [vmem:[%s2] sm:$0xff]
    %v62 = vld [vmem:[%s2 + $0x8] sm:$0xff]
    %64 = vset.pattern.permute.xlu0 0
    %65 = vperm.xlu0 %64, %v61
    %v66 = vpop.permute.xlu0 %65
    %69 = vset.pattern.permute.xlu0 0
    %70 = vperm.xlu0 %69, %v62
    %v71 = vpop.permute.xlu0 %70
    %vm73 = vcmask 64512
    %v75 = vsel %vm73, %v45, 0
    %v78 = vsel %vm73, %v46, 0
    %80 = vmatprep.subr.mxu0 0.0
    %81 = vmatpush1.msra.mxu0 0.0
    %82 = vmatprep.subr.mxu0 0.0
    %83 = vmatpush1.msra.mxu0 0.0
    %84 = vmatprep.subr.mxu0 0.0
    %85 = vmatpush1.msra.mxu0 0.0
    %86 = vmatprep.subr.mxu0 0.0
    %87 = vmatpush1.msra.mxu0 0.0
    %88 = vmatprep.subr.mxu0 0.0
    %89 = vmatpush1.msra.mxu0 0.0
    %90 = vmatprep.subr.mxu0 0.0
    %91 = vmatpush1.msra.mxu0 0.0
    %92 = vmatprep.subr.mxu0 0.0
    %93 = vmatpush1.msra.mxu0 0.0
    %94 = vmatprep.subr.mxu0 0.0
    %95 = vmatpush1.msra.mxu0 0.0
    %96 = vmatprep.subr.mxu0 0.0
    %97 = vmatpush1.msra.mxu0 0.0
    %98 = vmatprep.subr.mxu0 0.0
    %99 = vmatpush1.msra.mxu0 0.0
    %100 = vmatprep.subr.mxu0 0.0
    %101 = vmatpush1.msra.mxu0 0.0
    %102 = vmatprep.subr.mxu0 0.0
    %103 = vmatpush1.msra.mxu0 0.0
    %104 = vmatprep.subr.mxu0 0.0
    %105 = vmatpush1.msra.mxu0 0.0
    %106 = vmatprep.subr.mxu0 0.0
    %107 = vmatpush1.msra.mxu0 0.0
    %108 = vmatprep.subr.mxu0 0.0
    %109 = vmatpush1.msra.mxu0 0.0
    %110 = vmatprep.subr.mxu0 0.0
    %111 = vmatpush1.msra.mxu0 %v60
    %112 = vmatprep.subr.mxu0 0.0
    %113 = vmatpush2.msra.mxu0 0.0
    %114 = vmatprep.subr.mxu0 0.0
    %115 = vmatpush2.msra.mxu0 0.0
    %116 = vmatprep.subr.mxu0 0.0
    %117 = vmatpush2.msra.mxu0 0.0
    %118 = vmatprep.subr.mxu0 0.0
    %119 = vmatpush2.msra.mxu0 0.0
    %120 = vmatprep.subr.mxu0 0.0
    %121 = vmatpush2.msra.mxu0 0.0
    %122 = vmatprep.subr.mxu0 0.0
    %123 = vmatpush2.msra.mxu0 0.0
    %124 = vmatprep.subr.mxu0 0.0
    %125 = vmatpush2.msra.mxu0 0.0
    %126 = vmatprep.subr.mxu0 0.0
    %127 = vmatpush2.msra.mxu0 0.0
    %128 = vmatprep.subr.mxu0 0.0
    %129 = vmatpush2.msra.mxu0 0.0
    %130 = vmatprep.subr.mxu0 0.0
    %131 = vmatpush2.msra.mxu0 0.0
    %132 = vmatprep.subr.mxu0 0.0
    %133 = vmatpush2.msra.mxu0 0.0
    %134 = vmatprep.subr.mxu0 0.0
    %135 = vmatpush2.msra.mxu0 0.0
    %136 = vmatprep.subr.mxu0 0.0
    %137 = vmatpush2.msra.mxu0 0.0
    %138 = vmatprep.subr.mxu0 0.0
    %139 = vmatpush2.msra.mxu0 0.0
    %140 = vmatprep.subr.mxu0 0.0
    %141 = vmatpush2.msra.mxu0 0.0
    %142 = vmatprep.subr.mxu0 0.0
    %143 = vmatpush2.msra.mxu0 0.0
    %144 = vmatprep.mubr.f32.mxu0 0.0
    %145 = vmatmul.mubr.f32.gmra.mxu0 %v75
    %v146 = vpop.f32.mrf.mxu0
    %v147 = vadd.f32 %v66, %v146
    %v148 = vpop.f32.mrf.mxu0
    %149 = vmatprep.mubr.f32.mxu0 0.0
    %150 = vmatmul.mubr.f32.gmra.mxu0 %v78
    %v151 = vpop.f32.mrf.mxu0
    %v152 = vadd.f32 %v71, %v151
    %v153 = vpop.f32.mrf.mxu0
    %154 = vdwg.mxu0
    %v155 = vmax.f32 %v147, 0.0
    %v156 = vld [vmem:[%s3] sm:$0xff]
    %158 = vrot.lane.b32.xlu0 %v155, 2
    %v159 = vpop.permute.xlu0 %158
    %v161 = vsel %vm51, 0.0, %v159
    %v162 = vsel %vm55, %v161, 0.0
    %v163 = vld [vmem:[%s4] sm:$0xff]
    %165 = vset.pattern.permute.xlu0 0
    %166 = vperm.xlu0 %165, %v163
    %v167 = vpop.permute.xlu0 %166
    %vm169 = vcmask 130048
    %v171 = vsel %vm169, %v156, 0
    %173 = vmatprep.subr.mxu0 0.0
    %174 = vmatpush1.msra.mxu0 0.0
    %175 = vmatprep.subr.mxu0 0.0
    %176 = vmatpush1.msra.mxu0 0.0
    %177 = vmatprep.subr.mxu0 0.0
    %178 = vmatpush1.msra.mxu0 0.0
    %179 = vmatprep.subr.mxu0 0.0
    %180 = vmatpush1.msra.mxu0 0.0
    %181 = vmatprep.subr.mxu0 0.0
    %182 = vmatpush1.msra.mxu0 0.0
    %183 = vmatprep.subr.mxu0 0.0
    %184 = vmatpush1.msra.mxu0 0.0
    %185 = vmatprep.subr.mxu0 0.0
    %186 = vmatpush1.msra.mxu0 0.0
    %187 = vmatprep.subr.mxu0 0.0
    %188 = vmatpush1.msra.mxu0 0.0
    %189 = vmatprep.subr.mxu0 0.0
    %190 = vmatpush1.msra.mxu0 0.0
    %191 = vmatprep.subr.mxu0 0.0
    %192 = vmatpush1.msra.mxu0 0.0
    %193 = vmatprep.subr.mxu0 0.0
    %194 = vmatpush1.msra.mxu0 0.0
    %195 = vmatprep.subr.mxu0 0.0
    %196 = vmatpush1.msra.mxu0 0.0
    %197 = vmatprep.subr.mxu0 0.0
    %198 = vmatpush1.msra.mxu0 0.0
    %199 = vmatprep.subr.mxu0 0.0
    %200 = vmatpush1.msra.mxu0 0.0
    %201 = vmatprep.subr.mxu0 0.0
    %202 = vmatpush1.msra.mxu0 %v155
    %203 = vmatprep.subr.mxu0 0.0
    %204 = vmatpush1.msra.mxu0 %v162
    %205 = vmatprep.subr.mxu0 0.0
    %206 = vmatpush2.msra.mxu0 0.0
    %207 = vmatprep.subr.mxu0 0.0
    %208 = vmatpush2.msra.mxu0 0.0
    %209 = vmatprep.subr.mxu0 0.0
    %210 = vmatpush2.msra.mxu0 0.0
    %211 = vmatprep.subr.mxu0 0.0
    %212 = vmatpush2.msra.mxu0 0.0
    %213 = vmatprep.subr.mxu0 0.0
    %214 = vmatpush2.msra.mxu0 0.0
    %215 = vmatprep.subr.mxu0 0.0
    %216 = vmatpush2.msra.mxu0 0.0
    %217 = vmatprep.subr.mxu0 0.0
    %218 = vmatpush2.msra.mxu0 0.0
    %219 = vmatprep.subr.mxu0 0.0
    %220 = vmatpush2.msra.mxu0 0.0
    %221 = vmatprep.subr.mxu0 0.0
    %222 = vmatpush2.msra.mxu0 0.0
    %223 = vmatprep.subr.mxu0 0.0
    %224 = vmatpush2.msra.mxu0 0.0
    %225 = vmatprep.subr.mxu0 0.0
    %226 = vmatpush2.msra.mxu0 0.0
    %227 = vmatprep.subr.mxu0 0.0
    %228 = vmatpush2.msra.mxu0 0.0
    %229 = vmatprep.subr.mxu0 0.0
    %230 = vmatpush2.msra.mxu0 0.0
    %231 = vmatprep.subr.mxu0 0.0
    %232 = vmatpush2.msra.mxu0 0.0
    %233 = vmatprep.subr.mxu0 0.0
    %234 = vmatpush2.msra.mxu0 0.0
    %235 = vmatprep.subr.mxu0 0.0
    %236 = vmatpush2.msra.mxu0 0.0
    %237 = vmatprep.mubr.f32.mxu0 0.0
    %238 = vmatmul.mubr.f32.gmra.mxu0 %v171
    %v239 = vpop.f32.mrf.mxu0
    %v240 = vadd.f32 %v167, %v239
    %v241 = vpop.f32.mrf.mxu0
    %242 = vdwg.mxu0
    %v243 = vmax.f32 %v240, 0.0
    %v244 = vadd.f32 %v243, %v152
    %v245 = vmax.f32 %v244, 0.0
    %v246 = vmul.f32 %v245, %v44
    %247 = vadd.xlane.f32.xlu0 %v246
    %v248 = vpop.xlane.xlu0 %247
    %v249 = vmul.f32 %v248, 0.015625
    %v250 = vmul.f32 %v246, %v246
    %251 = vadd.xlane.f32.xlu0 %v250
    %v252 = vpop.xlane.xlu0 %251
    %v253 = vmul.f32 %v252, 0.015625
    %v254 = vmul.f32 %v249, %v249
    %v255 = vsub.f32 %v253, %v254
    %v256 = vadd.f32 %v255, 1e-05
    %v257 = vrsqrt.pop %v256
    %v258 = vsub.f32 %v245, %v249
    %v259 = vmul.f32 %v258, %v257
    %v260 = vld [vmem:[%s5] sm:$0xff]
    %262 = vset.pattern.permute.xlu0 0
    %263 = vperm.xlu0 %262, %v260
    %v264 = vpop.permute.xlu0 %263
    %v266 = vmul.f32 %v259, %v264
    %v267 = vld [vmem:[%s6] sm:$0xff]
    %269 = vset.pattern.permute.xlu0 0
    %270 = vperm.xlu0 %269, %v267
    %v271 = vpop.permute.xlu0 %270
    %v273 = vadd.f32 %v266, %v271
    %274 = vst [vmem:[#allocation2] sm:$0xff] %v273
    // Predicated region
    $region30: #{tpu_custom_call.1} parent=1 // pred_check
      _
    $region31: #{tpu_custom_call.1} parent=1 // pred_check_branch
      %276 = sbr.rel (0) target = $region33
    $region32: #{tpu_custom_call.1} parent=1 // pred_region
      %s278 = ssub.s32 128, 128
      %279 = vsyncadd [#allocation3], %s278
      %s281 = sshll.u32 [#allocation2], 4
      %s282 = int_to_ptr.vmem [resolvable:$true] %s281
      %284 = dma.vmem_to_hbm [thread:$0]  %s282, 128, %s7, [#allocation3]
    $region33: #{tpu_custom_call.1} parent=1 // pred_fallthru
      _
    // Predicated region
    $region34: #{tpu_custom_call.1} parent=1 // pred_check
      _
    $region35: #{tpu_custom_call.1} parent=1 // pred_check_branch
      %286 = sbr.rel (0) target = $region37
    $region36: #{tpu_custom_call.1} parent=1 // pred_region
      %287 = dma.done [#allocation3], 128
    $region37: #{tpu_custom_call.1} parent=1 // pred_fallthru
      _
    %288 = vsyncpa [#allocation3], 1

</llo_original>
